<compile_context>
chip_gen: v7x
topology: tpu7x:2x2x1
jax: 0.10.0
libtpu: 0.0.40
codegen_flags: <defaults>
</compile_context>

<pallas_src>
import math

import jax
import jax.numpy as jnp
from jax.experimental import pallas as pl
from jax.experimental.pallas import tpu as pltpu

WIN = 4
SEQ = WIN * WIN  # 16 pixels per window


def _window_attention_kernel(x_ref, w_ref, b_ref, mask_ref, gamma_ref, o_ref):
    """One grid step: a (C, PB) strip of NCHW-flattened pixels (whole windows).

    x_ref    : (1, C, PB)  pixels of one image strip; channels on sublanes,
                           raster-ordered pixels on lanes (lane-dense).
    w_ref    : (O, C)      fused [Wq; Wk; Wv] conv weights (out, in), resident.
    b_ref    : (O, 1)      fused bias, resident.
    mask_ref : (TQ, TQ)    additive same-window mask (0 / -1e30), resident.
    gamma_ref: (1, 1)      SMEM scalar.
    o_ref    : (1, C, PB)  gamma * attn_out + x, same layout as x.
    """
    C = x_ref.shape[1]
    PB = x_ref.shape[2]
    O = w_ref.shape[0]
    C4 = (O - C) // 2
    TQ = mask_ref.shape[0]
    n_tiles = PB // TQ

    x = x_ref[0].astype(jnp.float32)                      # (C, PB)
    w = w_ref[...].astype(jnp.float32)                    # (O, C)
    b = b_ref[...].astype(jnp.float32)                    # (O, 1)

    # Fused Q|K|V 1x1-conv projection: one lane-dense MXU matmul for the whole
    # pixel block (f32 end-to-end for the 1e-4 tolerance).
    y = jnp.dot(w, x, preferred_element_type=jnp.float32) + b   # (O, PB)
    q_all = y[:C4]                                        # (C4, PB)
    k_all = y[C4:2 * C4]                                  # (C4, PB)
    v_all = y[2 * C4:]                                    # (C , PB)

    bias = mask_ref[...]                                  # (TQ, TQ), resident
    gamma = gamma_ref[0, 0]

    # Stream score/softmax/PV one (TQ, TQ) tile at a time.  Each tile covers
    # whole windows, so attention never crosses a tile boundary and the mask is
    # identical for every tile.  n_tiles is static -> fully unrolled.
    for t in range(n_tiles):
        sl = slice(t * TQ, (t + 1) * TQ)                  # static, 128-aligned
        q = q_all[:, sl]                                  # (C4, TQ)
        k = k_all[:, sl]                                  # (C4, TQ)
        v = v_all[:, sl]                                  # (C , TQ)

        # s[k_pix, q_pix]: keys on sublanes, queries on lanes, so the softmax
        # normalizer lands lane-aligned with the (C, TQ) output (no transpose).
        s = jax.lax.dot_general(k, q, (((0,), (0,)), ((), ())),
                                preferred_element_type=jnp.float32)  # (TQ, TQ)
        s = s + bias                                      # mask cross-window pairs

        m = jnp.max(s, axis=0, keepdims=True)             # (1, TQ)
        p = jnp.exp(s - m)                                # masked entries -> 0
        l = jnp.sum(p, axis=0, keepdims=True)             # (1, TQ)

        o = jnp.dot(v, p, preferred_element_type=jnp.float32)        # (C, TQ)
        # Fold normalization into the small (C, TQ) output; exact reciprocal.
        o = o * pl.reciprocal(l, approx=False)

        o_ref[0, :, sl] = (gamma * o + x[:, sl]).astype(o_ref.dtype)


def window_attention_pallas(x, wq, bq, wk, bk, wv, bv, gamma,
                            *, vmem_budget_bytes=12 << 20, max_tiles_per_step=8):
    """x: (B, C, H, W) NCHW.  wq/wk: (C//4, C), wv: (C, C) (conv-style (out,in)).
    bq/bk: (C//4,), bv: (C,).  gamma: scalar.  Returns (B, C, H, W)."""
    B, C, H, W = x.shape
    assert C % 4 == 0, "in_dim must be divisible by 4 (to_q/to_k out = C//4)"
    assert H % WIN == 0 and W % WIN == 0
    C4 = C // 4
    assert wq.shape == (C4, C) and wk.shape == (C4, C) and wv.shape == (C, C)
    assert bq.shape == (C4,) and bk.shape == (C4,) and bv.shape == (C,)
    O = 2 * C4 + C

    P = H * W
    # Score-tile size: whole window-rows (multiple of 4*W) and lane-aligned
    # (multiple of 128)  ->  TQ = lcm(4*W, 128).
    TQ = (4 * W) * (128 // math.gcd(4 * W, 128))
    # TODO(synk): pad the pixel axis for shapes where H*W is not a multiple of
    # TQ instead of asserting.
    assert P % TQ == 0, f"H*W={P} must be a multiple of the score tile {TQ}"
    tiles_per_image = P // TQ

    # Tiles per grid step: largest divisor of tiles_per_image whose working set
    # fits a conservative per-step VMEM budget (safe on v7x's 64 MiB/TC), kept
    # small enough that the pixel axis still has >= 2 steps per image
    # (megacore balance) and the in-kernel unroll stays bounded.
    def step_bytes(tpb):
        pb = tpb * TQ
        io = 2 * 2 * C * pb * 4               # double-buffered x in + o out
        act = (O * pb + 2 * C * pb) * 4       # y + f32 x / o working copies
        sm = 3 * TQ * TQ * 4                  # one streamed score/prob tile
        resident = (O * C + O + TQ * TQ) * 4 * 2
        return io + act + sm + resident

    cap = tiles_per_image // 2 if tiles_per_image >= 2 else 1
    cap = max(1, min(cap, max_tiles_per_step))
    tpb = 1
    for cand in range(1, cap + 1):
        if tiles_per_image % cand == 0 and step_bytes(cand) <= vmem_budget_bytes:
            tpb = cand
    PB = tpb * TQ
    n_pix_steps = tiles_per_image // tpb

    # Free relayout: contiguous NCHW -> (B, C, H*W).  Tiny one-time fusions.
    x_flat = x.reshape(B, C, P)
    w_qkv = jnp.concatenate([wq, wk, wv], axis=0).astype(jnp.float32)       # (O, C)
    b_qkv = jnp.concatenate([bq, bk, bv], axis=0).reshape(O, 1).astype(jnp.float32)

    # Same-window additive mask for one TQ tile (identical for every tile since
    # tile starts are multiples of 4*W): hoisted out of the kernel, resident.
    r = jnp.arange(TQ)
    win_id = (r // (4 * W)) * (W // WIN) + (r % W) // WIN
    same = win_id[:, None] == win_id[None, :]
    mask_bias = jnp.where(same, 0.0, -1e30).astype(jnp.float32)             # (TQ, TQ)

    gamma_arr = jnp.asarray(gamma, dtype=jnp.float32).reshape(1, 1)

    out_flat = pl.pallas_call(
        _window_attention_kernel,
        out_shape=jax.ShapeDtypeStruct((B, C, P), x.dtype),
        grid_spec=pltpu.PrefetchScalarGridSpec(
            num_scalar_prefetch=0,
            grid=(B, n_pix_steps),
            in_specs=[
                pl.BlockSpec((1, C, PB), lambda b, t: (b, 0, t)),      # pixels
                pl.BlockSpec((O, C), lambda b, t: (0, 0)),             # fused W
                pl.BlockSpec((O, 1), lambda b, t: (0, 0)),             # fused bias
                pl.BlockSpec((TQ, TQ), lambda b, t: (0, 0)),           # window mask
                pl.BlockSpec(memory_space=pltpu.MemorySpace.SMEM),     # gamma
            ],
            out_specs=pl.BlockSpec((1, C, PB), lambda b, t: (b, 0, t)),
        ),
        compiler_params=pltpu.CompilerParams(
            dimension_semantics=("parallel", "parallel"),
            vmem_limit_bytes=32 * 1024 * 1024,   # > v5e's 16 MiB default, <= v7x budget
        ),
    )(x_flat, w_qkv, b_qkv, mask_bias, gamma_arr)

    return out_flat.reshape(B, C, H, W)


def window_attention_ref(x, wq, bq, wk, bk, wv, bv, gamma):
    """Pure-JAX reference reproducing the PyTorch forward."""
    B, C, H, W = x.shape
    xn = jnp.transpose(x, (0, 2, 3, 1))
    xw = xn.reshape(B, H // WIN, WIN, W // WIN, WIN, C)
    xw = jnp.transpose(xw, (0, 1, 3, 2, 4, 5)).reshape(-1, SEQ, C)
    q = xw @ wq.T + bq
    k = xw @ wk.T + bk
    v = xw @ wv.T + bv
    s = jnp.einsum('wqd,wkd->wqk', q, k)
    a = jax.nn.softmax(s, axis=-1)
    o = jnp.einsum('wqk,wkc->wqc', a, v)
    o = gamma * o + xw
    o = o.reshape(B, H // WIN, W // WIN, WIN, WIN, C)
    o = jnp.transpose(o, (0, 1, 3, 2, 4, 5)).reshape(B, H, W, C)
    return jnp.transpose(o, (0, 3, 1, 2))


if __name__ == "__main__":
    B, C, H, W = 2, 32, 16, 16  # in_dim = 32 (divisible by 4)
    key = jax.random.PRNGKey(0)
    kx, kq, kk, kv, kbq, kbk, kbv = jax.random.split(key, 7)

    x = jax.random.normal(kx, (B, C, H, W), dtype=jnp.float32)

    # Parameters (deterministic, in-script).  Conv2d(1x1) weights stored
    # conv-style as (out_channels, in_channels).
    scale = 1.0 / jnp.sqrt(jnp.float32(C))
    wq = jax.random.normal(kq, (C // 4, C), dtype=jnp.float32) * scale
    wk = jax.random.normal(kk, (C // 4, C), dtype=jnp.float32) * scale
    wv = jax.random.normal(kv, (C, C), dtype=jnp.float32) * scale
    bq = jax.random.normal(kbq, (C // 4,), dtype=jnp.float32) * 0.1
    bk = jax.random.normal(kbk, (C // 4,), dtype=jnp.float32) * 0.1
    bv = jax.random.normal(kbv, (C,), dtype=jnp.float32) * 0.1
    # Module init has gamma = 0 (output == x); use a nonzero deterministic
    # value so the attention path is actually exercised/verified.
    gamma = jnp.float32(0.5)

    out = window_attention_pallas(x, wq, bq, wk, bk, wv, bv, gamma)
    out = jax.block_until_ready(out)

    ref = window_attention_ref(x, wq, bq, wk, bk, wv, bv, gamma)
    assert out.shape == (B, C, H, W)
    assert jnp.allclose(out, ref, atol=1e-4, rtol=1e-4)
    print("KERNEL_OK")
</pallas_src>

<mosaic_0001>
module attributes {stable_mosaic.version = 11 : i64} {
  func.func @_window_attention_kernel(%arg0: i32, %arg1: i32, %arg2: memref<1x32x128xf32, #tpu.memory_space<vmem>>, %arg3: memref<48x32xf32, #tpu.memory_space<vmem>>, %arg4: memref<48x1xf32, #tpu.memory_space<vmem>>, %arg5: memref<128x128xf32, #tpu.memory_space<vmem>>, %arg6: memref<1x1xf32, #tpu.memory_space<smem>>, %arg7: memref<1x32x128xf32, #tpu.memory_space<vmem>>) attributes {dimension_semantics = [#tpu.dimension_semantics<parallel>, #tpu.dimension_semantics<parallel>], iteration_bounds = array<i64: 2, 2>, scalar_prefetch = 0 : i64, scratch_operands = 0 : i64, tpu.core_type = #tpu.core_type<tc>, window_params = [{transform_indices = @transform_0, window_bounds = array<i64: 1, 32, 128>}, {pipeline_mode = #tpu.pipeline_mode<synchronous>, transform_indices = @transform_1, window_bounds = array<i64: 48, 32>}, {pipeline_mode = #tpu.pipeline_mode<synchronous>, transform_indices = @transform_2, window_bounds = array<i64: 48, 1>}, {pipeline_mode = #tpu.pipeline_mode<synchronous>, transform_indices = @transform_3, window_bounds = array<i64: 128, 128>}, {transform_indices = @transform_4, window_bounds = array<i64: 1, 1>}, {transform_indices = @transform_5, window_bounds = array<i64: 1, 32, 128>}]} {
    %c0 = arith.constant 0 : index
    %c0_0 = arith.constant 0 : index
    %c0_1 = arith.constant 0 : index
    %0 = vector.load %arg2[%c0, %c0_0, %c0_1] : memref<1x32x128xf32, #tpu.memory_space<vmem>>, vector<1x32x128xf32>
    %1 = vector.shape_cast %0 : vector<1x32x128xf32> to vector<32x128xf32>
    %c0_2 = arith.constant 0 : index
    %c0_3 = arith.constant 0 : index
    %2 = vector.load %arg3[%c0_2, %c0_3] : memref<48x32xf32, #tpu.memory_space<vmem>>, vector<48x32xf32>
    %c0_4 = arith.constant 0 : index
    %c0_5 = arith.constant 0 : index
    %3 = vector.load %arg4[%c0_4, %c0_5] : memref<48x1xf32, #tpu.memory_space<vmem>>, vector<48x1xf32>
    %cst = arith.constant dense<0.000000e+00> : vector<48x128xf32>
    %4 = tpu.matmul %2, %1, %cst {dimension_numbers = #tpu.dot_dimension_numbers<[1], [0], [0], [1], [0, 0, 1, 1], [], []>} : vector<48x32xf32>, vector<32x128xf32>, vector<48x128xf32> -> vector<48x128xf32>
    %5 = vector.broadcast %3 : vector<48x1xf32> to vector<48x128xf32>
    %6 = arith.addf %4, %5 : vector<48x128xf32>
    %7 = vector.extract_strided_slice %6 {offsets = [0, 0], sizes = [8, 128], strides = [1, 1]} : vector<48x128xf32> to vector<8x128xf32>
    %8 = vector.extract_strided_slice %6 {offsets = [8, 0], sizes = [8, 128], strides = [1, 1]} : vector<48x128xf32> to vector<8x128xf32>
    %9 = vector.extract_strided_slice %6 {offsets = [16, 0], sizes = [32, 128], strides = [1, 1]} : vector<48x128xf32> to vector<32x128xf32>
    %c0_6 = arith.constant 0 : index
    %c0_7 = arith.constant 0 : index
    %10 = vector.load %arg5[%c0_6, %c0_7] : memref<128x128xf32, #tpu.memory_space<vmem>>, vector<128x128xf32>
    %c0_8 = arith.constant 0 : index
    %c0_9 = arith.constant 0 : index
    %11 = memref.load %arg6[%c0_8, %c0_9] : memref<1x1xf32, #tpu.memory_space<smem>>
    %cst_10 = arith.constant dense<0.000000e+00> : vector<128x128xf32>
    %12 = tpu.matmul %8, %7, %cst_10 {dimension_numbers = #tpu.dot_dimension_numbers<[0], [0], [1], [1], [0, 1, 1, 1], [], []>} : vector<8x128xf32>, vector<8x128xf32>, vector<128x128xf32> -> vector<128x128xf32>
    %13 = arith.addf %12, %10 : vector<128x128xf32>
    %cst_11 = arith.constant dense<0xFF800000> : vector<128xf32>
    %14 = vector.multi_reduction <maximumf>, %13, %cst_11 [0] : vector<128x128xf32> to vector<128xf32>
    %15 = vector.shape_cast %14 : vector<128xf32> to vector<1x128xf32>
    %16 = vector.broadcast %15 : vector<1x128xf32> to vector<128x128xf32>
    %17 = arith.subf %13, %16 : vector<128x128xf32>
    %18 = math.exp %17 : vector<128x128xf32>
    %cst_12 = arith.constant dense<0.000000e+00> : vector<128xf32>
    %19 = vector.multi_reduction <add>, %18, %cst_12 [0] : vector<128x128xf32> to vector<128xf32>
    %20 = vector.shape_cast %19 : vector<128xf32> to vector<1x128xf32>
    %cst_13 = arith.constant dense<0.000000e+00> : vector<32x128xf32>
    %21 = tpu.matmul %9, %18, %cst_13 {dimension_numbers = #tpu.dot_dimension_numbers<[1], [0], [0], [1], [0, 0, 1, 1], [], []>} : vector<32x128xf32>, vector<128x128xf32>, vector<32x128xf32> -> vector<32x128xf32>
    %22 = tpu.reciprocal %20 : vector<1x128xf32> -> vector<1x128xf32>
    %23 = vector.broadcast %22 : vector<1x128xf32> to vector<32x128xf32>
    %24 = arith.mulf %21, %23 : vector<32x128xf32>
    %25 = vector.broadcast %11 : f32 to vector<32x128xf32>
    %26 = arith.mulf %25, %24 : vector<32x128xf32>
    %27 = arith.addf %26, %1 : vector<32x128xf32>
    %c0_14 = arith.constant 0 : index
    %c0_15 = arith.constant 0 : index
    %c0_16 = arith.constant 0 : index
    %28 = vector.load %arg7[%c0_14, %c0_15, %c0_16] : memref<1x32x128xf32, #tpu.memory_space<vmem>>, vector<1x32x128xf32>
    %29 = vector.shape_cast %28 : vector<1x32x128xf32> to vector<32x128xf32>
    %30 = vector.shape_cast %27 : vector<32x128xf32> to vector<1x32x128xf32>
    tpu.vector_store %arg7[%c0_14, %c0_15, %c0_16], %30 {strides = array<i32>} : memref<1x32x128xf32, #tpu.memory_space<vmem>>, vector<1x32x128xf32>,
    return
  }
  func.func @transform_0(%arg0: i32, %arg1: i32) -> (i32, i32, i32) {
    %c0_i32 = arith.constant 0 : i32
    %c0_i32_0 = arith.constant 0 : i32
    return %arg0, %c0_i32, %arg1 : i32, i32, i32
  }
  func.func @transform_1(%arg0: i32, %arg1: i32) -> (i32, i32) {
    %c0_i32 = arith.constant 0 : i32
    %c0_i32_0 = arith.constant 0 : i32
    %c0_i32_1 = arith.constant 0 : i32
    return %c0_i32, %c0_i32_0 : i32, i32
  }
  func.func @transform_2(%arg0: i32, %arg1: i32) -> (i32, i32) {
    %c0_i32 = arith.constant 0 : i32
    %c0_i32_0 = arith.constant 0 : i32
    %c0_i32_1 = arith.constant 0 : i32
    return %c0_i32, %c0_i32_0 : i32, i32
  }
  func.func @transform_3(%arg0: i32, %arg1: i32) -> (i32, i32) {
    %c0_i32 = arith.constant 0 : i32
    %c0_i32_0 = arith.constant 0 : i32
    %c0_i32_1 = arith.constant 0 : i32
    return %c0_i32, %c0_i32_0 : i32, i32
  }
  func.func @transform_4(%arg0: i32, %arg1: i32) -> (i32, i32) {
    %c0_i32 = arith.constant 0 : i32
    %c0_i32_0 = arith.constant 0 : i32
    %c0_i32_1 = arith.constant 0 : i32
    return %c0_i32, %c0_i32_0 : i32, i32
  }
  func.func @transform_5(%arg0: i32, %arg1: i32) -> (i32, i32, i32) {
    %c0_i32 = arith.constant 0 : i32
    %c0_i32_0 = arith.constant 0 : i32
    return %arg0, %c0_i32, %arg1 : i32, i32, i32
  }
}

</mosaic_0001>

<llo_original>
// kernel: tpu_custom_call.1
$region0: #{tpu_custom_call.1}
  #allocation0 [shape = 'u32[]', space=smem, size = 0x4, offset = 0x4, fixed_abs, tag = 'smem constant byte address 0x4 - core index']
  #allocation1 [shape = 'u32[144,128]{1,0:T(1,128)}', space=vmem, size = 0x12000, scoped, tag = 'internal scratch']
  #allocation2 [shape = 'f32[1,1]{1,0:T(1,128)S(6)}', space=smem, size = 0x200, scoped, tag = 'scoped memory for tpu_custom_call.1']
  %s0 = inlined_call_operand.vmem [shape: f32[2,32,256], index: 0, kind: input, shape index: {}]
  %s1 = inlined_call_operand.vmem [shape: f32[48,32], index: 1, kind: input, shape index: {}]
  %s2 = inlined_call_operand.vmem [shape: f32[48,1], index: 2, kind: input, shape index: {}]
  %s3 = inlined_call_operand.hbm [shape: f32[128,128], index: 3, kind: input, shape index: {}]
  %s4 = inlined_call_operand.<no memory space> [shape: f32[1,1], index: 4, kind: input, shape index: {}]
  %s5 = inlined_call_operand.hbm [shape: f32[2,32,256], index: 5, kind: output, shape index: {}]
  %s6 = sld [smem:[#allocation0]]
  $region95: #{tpu_custom_call.1} parent=0
    _
  %s8 = ssub.s32 1, %s6
  %s9 = scalar_select 0, %s8, %s6
  %10 = sst [smem:[#allocation2]] %s4
  $region1: #{tpu_custom_call.1} parent=0
    #allocation3 [shape = 'u8[32768]{0}', space=vmem, size = 0x8000, scoped, tag = 'input window, operand 0']
    #allocation4 [shape = 'u8[65536]{0}', space=vmem, size = 0x10000, scoped, tag = 'input window, operand 3, single buffered']
    #allocation5 [shape = 's32[2]{0}', space=sflag, size = 0x8, scoped, tag = 'scoped memory for tpu_custom_call.1']
    #allocation6 [shape = 's32[2]{0}', space=sflag, size = 0x8, scoped, tag = 'scoped memory for tpu_custom_call.1']
    #allocation7 [shape = 'u8[32768]{0}', space=vmem, size = 0x8000, scoped, tag = 'output window, operand 0']
    %11 = vsyncpa [#allocation5], 0
    %12 = vsyncpa [#allocation6], 0
    %s13 = scalar_lea.sflag [#allocation6], 1
    %14 = vsyncpa %s13, 0
    loop: start=0, step=1, limit=6
    $region2: #{tpu_custom_call.1} parent=1 // loop_pre_header
      _
    $region3: #{tpu_custom_call.1} parent=1 // loop_header
      %s16 = sphi 0, %s20
      %p17 = scmp.ge.s32.totalorder %s16, 6
      %s23 = sphi 0, %s35
      %s24 = sphi 0, %s31
      %s25 = sphi 0, %s23
      %s26 = sphi 0, %s24
      %s27 = sphi 0, %s25
      %s28 = sphi 0, %s26
      %s40 = sphi 0, %s42
      %s43 = sphi 0, %s40
      %s44 = sphi 0, %s43
      %s60 = sphi 0, %s44
      %s64 = sphi 0, %s64
      %s66 = sphi 0, %s64
      %s67 = sphi 0, %s66
      %s81 = sphi 0, %s67
      %s85 = sphi 0, %s85
      %s87 = sphi 0, %s85
      %s88 = sphi 0, %s87
      %s102 = sphi 0, %s88
      %s106 = sphi 0, %s106
      %s108 = sphi 0, %s106
      %s109 = sphi 0, %s108
      %s123 = sphi 0, %s109
      %s127 = sphi 0, %s127
      %s129 = sphi 0, %s127
      %s130 = sphi 0, %s129
      %s144 = sphi 0, %s130
      %s152 = sphi 0, %s154
      %s155 = sphi 0, %s152
      %s156 = sphi 0, %s155
      %s172 = sphi 0, %s156
    $region4: #{tpu_custom_call.1} parent=1 // loop_header_branch
      %19 = sbr.rel (%p17) target = $region8
    $region5: #{tpu_custom_call.1} parent=1 // loop_body
      %s21 = ssub.s32 %s16, 1
      %s22 = ssub.s32 %s16, 2
      %s29 = sadd.s32 1, %s24
      %p30 = scmp.ge.s32.totalorder %s29, 2
      %s31 = scalar_select %p30, 0, %s29
      %s32 = sadd.s32 1, %s23
      %s33 = scalar_select %p30, %s32, %s23
      %p34 = scmp.ge.s32.totalorder %s33, 2
      %s35 = scalar_select %p34, 0, %s33
      %s36 = ssub.s32 %s23, %s35
      %s37 = ssub.s32 %s24, %s31
      %s38 = sor.u32 %s36, %s37
      %p39 = scmp.eq.s32.totalorder %s38, 0
      %s41 = sadd.s32 %s40, 1
      %s42 = scalar_select %p39, %s40, %s41
      %p45 = pneg %p39
      %p46 = scmp.eq.s32.totalorder %s16, 3
      %p47 = por %p45, %p46
      %p48 = scmp.ne.s32.totalorder %s40, %s43
      %p49 = scmp.eq.s32.totalorder %s16, 0
      %p50 = por %p48, %p49
      %p51 = scmp.ne.s32.totalorder %s40, %s43
      %p52 = scmp.eq.s32.totalorder %s21, 3
      %p53 = por %p51, %p52
      %p54 = scmp.ne.s32.totalorder %s43, %s44
      %p55 = scmp.eq.s32.totalorder %s21, 0
      %p56 = por %p54, %p55
      %p57 = scmp.ne.s32.totalorder %s43, %s44
      %p58 = scmp.eq.s32.totalorder %s22, 3
      %p59 = por %p57, %p58
      %p61 = scmp.ne.s32.totalorder %s44, %s60
      %p62 = scmp.eq.s32.totalorder %s22, 0
      %p63 = por %p61, %p62
      %s65 = sadd.s32 %s64, 1
      %p68 = scmp.eq.s32.totalorder %s16, 3
      %p69 = scmp.ne.s32.totalorder %s64, %s66
      %p70 = scmp.eq.s32.totalorder %s16, 0
      %p71 = por %p69, %p70
      %p72 = scmp.ne.s32.totalorder %s64, %s66
      %p73 = scmp.eq.s32.totalorder %s21, 3
      %p74 = por %p72, %p73
      %p75 = scmp.ne.s32.totalorder %s66, %s67
      %p76 = scmp.eq.s32.totalorder %s21, 0
      %p77 = por %p75, %p76
      %p78 = scmp.ne.s32.totalorder %s66, %s67
      %p79 = scmp.eq.s32.totalorder %s22, 3
      %p80 = por %p78, %p79
      %p82 = scmp.ne.s32.totalorder %s67, %s81
      %p83 = scmp.eq.s32.totalorder %s22, 0
      %p84 = por %p82, %p83
      %s86 = sadd.s32 %s85, 1
      %p89 = scmp.eq.s32.totalorder %s16, 3
      %p90 = scmp.ne.s32.totalorder %s85, %s87
      %p91 = scmp.eq.s32.totalorder %s16, 0
      %p92 = por %p90, %p91
      %p93 = scmp.ne.s32.totalorder %s85, %s87
      %p94 = scmp.eq.s32.totalorder %s21, 3
      %p95 = por %p93, %p94
      %p96 = scmp.ne.s32.totalorder %s87, %s88
      %p97 = scmp.eq.s32.totalorder %s21, 0
      %p98 = por %p96, %p97
      %p99 = scmp.ne.s32.totalorder %s87, %s88
      %p100 = scmp.eq.s32.totalorder %s22, 3
      %p101 = por %p99, %p100
      %p103 = scmp.ne.s32.totalorder %s88, %s102
      %p104 = scmp.eq.s32.totalorder %s22, 0
      %p105 = por %p103, %p104
      %s107 = sadd.s32 %s106, 1
      %p110 = scmp.eq.s32.totalorder %s16, 3
      %p111 = scmp.ne.s32.totalorder %s106, %s108
      %p112 = scmp.eq.s32.totalorder %s16, 0
      %p113 = por %p111, %p112
      %p114 = scmp.ne.s32.totalorder %s106, %s108
      %p115 = scmp.eq.s32.totalorder %s21, 3
      %p116 = por %p114, %p115
      %p117 = scmp.ne.s32.totalorder %s108, %s109
      %p118 = scmp.eq.s32.totalorder %s21, 0
      %p119 = por %p117, %p118
      %p120 = scmp.ne.s32.totalorder %s108, %s109
      %p121 = scmp.eq.s32.totalorder %s22, 3
      %p122 = por %p120, %p121
      %p124 = scmp.ne.s32.totalorder %s109, %s123
      %p125 = scmp.eq.s32.totalorder %s22, 0
      %p126 = por %p124, %p125
      %s128 = sadd.s32 %s127, 1
      %p131 = scmp.eq.s32.totalorder %s16, 3
      %p132 = scmp.ne.s32.totalorder %s127, %s129
      %p133 = scmp.eq.s32.totalorder %s16, 0
      %p134 = por %p132, %p133
      %p135 = scmp.ne.s32.totalorder %s127, %s129
      %p136 = scmp.eq.s32.totalorder %s21, 3
      %p137 = por %p135, %p136
      %p138 = scmp.ne.s32.totalorder %s129, %s130
      %p139 = scmp.eq.s32.totalorder %s21, 0
      %p140 = por %p138, %p139
      %p141 = scmp.ne.s32.totalorder %s129, %s130
      %p142 = scmp.eq.s32.totalorder %s22, 3
      %p143 = por %p141, %p142
      %p145 = scmp.ne.s32.totalorder %s130, %s144
      %p146 = scmp.eq.s32.totalorder %s22, 0
      %p147 = por %p145, %p146
      %s148 = ssub.s32 %s23, %s35
      %s149 = ssub.s32 %s24, %s31
      %s150 = sor.u32 %s148, %s149
      %p151 = scmp.eq.s32.totalorder %s150, 0
      %s153 = sadd.s32 %s152, 1
      %s154 = scalar_select %p151, %s152, %s153
      %p157 = pneg %p151
      %p158 = scmp.eq.s32.totalorder %s16, 3
      %p159 = por %p157, %p158
      %p160 = scmp.ne.s32.totalorder %s152, %s155
      %p161 = scmp.eq.s32.totalorder %s16, 0
      %p162 = por %p160, %p161
      %p163 = scmp.ne.s32.totalorder %s152, %s155
      %p164 = scmp.eq.s32.totalorder %s21, 3
      %p165 = por %p163, %p164
      %p166 = scmp.ne.s32.totalorder %s155, %s156
      %p167 = scmp.eq.s32.totalorder %s21, 0
      %p168 = por %p166, %p167
      %p169 = scmp.ne.s32.totalorder %s155, %s156
      %p170 = scmp.eq.s32.totalorder %s22, 3
      %p171 = por %p169, %p170
      %p173 = scmp.ne.s32.totalorder %s156, %s172
      %p174 = scmp.eq.s32.totalorder %s22, 0
      %p175 = por %p173, %p174
      %p176 = scmp.le.s32.totalorder 1, %s16
      %p177 = scmp.lt.s32.totalorder %s16, 5
      %p178 = pnand %p176, %p177
      %p179 = pneg %p178
      // Predicated region
      $region9: #{tpu_custom_call.1} parent=5 // pred_check
        _
      $region10: #{tpu_custom_call.1} parent=5 // pred_check_branch
        %181 = sbr.rel (%p178) target = $region12
      $region11: #{tpu_custom_call.1} parent=5 // pred_region
        %s182 = ssub.s32 %s16, 1
        // Predicated region
        $region13: #{tpu_custom_call.1} parent=11 // pred_check
          %p183 = pneg %p77
        $region14: #{tpu_custom_call.1} parent=11 // pred_check_branch
          %185 = sbr.rel (%p183) target = $region16
        $region15: #{tpu_custom_call.1} parent=11 // pred_region
          _
        $region16: #{tpu_custom_call.1} parent=11 // pred_fallthru
          _
        // Predicated region
        $region17: #{tpu_custom_call.1} parent=11 // pred_check
          %p186 = pneg %p98
        $region18: #{tpu_custom_call.1} parent=11 // pred_check_branch
          %188 = sbr.rel (%p186) target = $region20
        $region19: #{tpu_custom_call.1} parent=11 // pred_region
          _
        $region20: #{tpu_custom_call.1} parent=11 // pred_fallthru
          _
        // Predicated region
        $region21: #{tpu_custom_call.1} parent=11 // pred_check
          %p189 = pneg %p119
        $region22: #{tpu_custom_call.1} parent=11 // pred_check_branch
          %191 = sbr.rel (%p189) target = $region24
        $region23: #{tpu_custom_call.1} parent=11 // pred_region
          %s193 = ssub.s32 2048, 2048
          %194 = vsyncadd [#allocation5], %s193
          %s195 = sshll.u32 [#allocation4], 4
          %s196 = int_to_ptr.vmem [resolvable:$true] %s195
          %201 = dma.hbm_to_vmem [thread:$0]  %s3, 2048, %s196, [#allocation5], 128, 128, 8
        $region24: #{tpu_custom_call.1} parent=11 // pred_fallthru
          _
        // Predicated region
        $region25: #{tpu_custom_call.1} parent=11 // pred_check
          %p202 = pneg %p140
        $region26: #{tpu_custom_call.1} parent=11 // pred_check_branch
          %204 = sbr.rel (%p202) target = $region28
        $region27: #{tpu_custom_call.1} parent=11 // pred_region
          _
        $region28: #{tpu_custom_call.1} parent=11 // pred_fallthru
          _
      $region12: #{tpu_custom_call.1} parent=5 // pred_fallthru
        _
      %p205 = scmp.lt.s32.totalorder %s16, 4
      // Predicated region
      $region29: #{tpu_custom_call.1} parent=5 // pred_check
        %p206 = pneg %p205
      $region30: #{tpu_custom_call.1} parent=5 // pred_check_branch
        %208 = sbr.rel (%p206) target = $region32
      $region31: #{tpu_custom_call.1} parent=5 // pred_region
        // Predicated region
        $region33: #{tpu_custom_call.1} parent=31 // pred_check
          %p209 = pneg %p50
        $region34: #{tpu_custom_call.1} parent=31 // pred_check_branch
          %211 = sbr.rel (%p209) target = $region36
        $region35: #{tpu_custom_call.1} parent=31 // pred_region
          %s212 = sand.u32 %s40, 1
          %s213 = sand.u32 %s40, 1
          %s214 = smul.addr %s213, 32
          %s215 = scalar_lea.vmem [#allocation3], %s214
          %s216 = smul.addr %s23, 8
          %s217 = sadd.s32 %s24, %s216
          %s218 = smul.addr %s217, 8
          %s219 = scalar_lea.vmem %s0, %s218
          // Predicated region
          $region37: #{tpu_custom_call.1} parent=35 // pred_check
            _
          $region38: #{tpu_custom_call.1} parent=35 // pred_check_branch
            %221 = sbr.rel (0) target = $region40
          $region39: #{tpu_custom_call.1} parent=35 // pred_region
            // Predicated region
            $region41: #{tpu_custom_call.1} parent=39 // pred_check
              _
            $region42: #{tpu_custom_call.1} parent=39 // pred_check_branch
              %223 = sbr.rel (0) target = $region44
            $region43: #{tpu_custom_call.1} parent=39 // pred_region
              // Predicated region
              $region56: #{tpu_custom_call.1} parent=43 // pred_check
                _
              $region57: #{tpu_custom_call.1} parent=43 // pred_check_branch
                %244 = sbr.rel (0) target = $region59
              $region58: #{tpu_custom_call.1} parent=43 // pred_region
                loop: start=0, step=1, limit=1
                $region60: #{tpu_custom_call.1} parent=58 // loop_pre_header
                  _
                $region61: #{tpu_custom_call.1} parent=58 // loop_header
                  %s246 = sphi 0, %s250
                  %p247 = scmp.ge.s32.totalorder %s246, 1
                  %s251 = sphi %s219, %s219
                  %s252 = sphi %s215, %s215
                $region62: #{tpu_custom_call.1} parent=58 // loop_header_branch
                  %249 = sbr.rel (%p247) target = $region66
                $region63: #{tpu_custom_call.1} parent=58 // loop_body
                  %v253 = vld [vmem:[%s251] sm:$0xff]
                  %254 = vst [vmem:[%s252] sm:$0xff] %v253
                  %v255 = vld [vmem:[%s251 + $0x10] sm:$0xff]
                  %256 = vst [vmem:[%s252 + $0x8] sm:$0xff] %v255
                  %v257 = vld [vmem:[%s251 + $0x20] sm:$0xff]
                  %258 = vst [vmem:[%s252 + $0x10] sm:$0xff] %v257
                  %v259 = vld [vmem:[%s251 + $0x30] sm:$0xff]
                  %260 = vst [vmem:[%s252 + $0x18] sm:$0xff] %v259
                $region64: #{tpu_custom_call.1} parent=58 // loop_footer
                  %s250 = sadd.s32 1, %s246
                $region65: #{tpu_custom_call.1} parent=58 // loop_footer_branch
                  %245 = sbr.rel target = $region61
                $region66: #{tpu_custom_call.1} parent=58 // loop_exit
                  _
              $region59: #{tpu_custom_call.1} parent=43 // pred_fallthru
                _
              // Predicated region
              $region67: #{tpu_custom_call.1} parent=43 // pred_check
                _
              $region68: #{tpu_custom_call.1} parent=43 // pred_check_branch
                %262 = sbr.rel target = $region70
              $region69: #{tpu_custom_call.1} parent=43 // pred_region
                _
              $region70: #{tpu_custom_call.1} parent=43 // pred_fallthru
                _
            $region44: #{tpu_custom_call.1} parent=39 // pred_fallthru
              _
            // Predicated region
            $region45: #{tpu_custom_call.1} parent=39 // pred_check
              _
            $region46: #{tpu_custom_call.1} parent=39 // pred_check_branch
              %225 = sbr.rel target = $region48
            $region47: #{tpu_custom_call.1} parent=39 // pred_region
              loop: start=0, step=1, limit=1
              $region49: #{tpu_custom_call.1} parent=47 // loop_pre_header
                _
              $region50: #{tpu_custom_call.1} parent=47 // loop_header
                %s228 = sphi 0, %s232
                %p229 = scmp.ge.s32.totalorder %s228, 1
                %s233 = sphi %s219, %s219
                %s234 = sphi %s215, %s215
              $region51: #{tpu_custom_call.1} parent=47 // loop_header_branch
                %231 = sbr.rel (%p229) target = $region55
              $region52: #{tpu_custom_call.1} parent=47 // loop_body
                %v235 = vld [vmem:[%s233] sm:$0xff]
                %236 = vst [vmem:[%s234] sm:$0xff] %v235
                %v237 = vld [vmem:[%s233 + $0x10] sm:$0xff]
                %238 = vst [vmem:[%s234 + $0x8] sm:$0xff] %v237
                %v239 = vld [vmem:[%s233 + $0x20] sm:$0xff]
                %240 = vst [vmem:[%s234 + $0x10] sm:$0xff] %v239
                %v241 = vld [vmem:[%s233 + $0x30] sm:$0xff]
                %242 = vst [vmem:[%s234 + $0x18] sm:$0xff] %v241
              $region53: #{tpu_custom_call.1} parent=47 // loop_footer
                %s232 = sadd.s32 1, %s228
              $region54: #{tpu_custom_call.1} parent=47 // loop_footer_branch
                %227 = sbr.rel target = $region50
              $region55: #{tpu_custom_call.1} parent=47 // loop_exit
                _
            $region48: #{tpu_custom_call.1} parent=39 // pred_fallthru
              _
          $region40: #{tpu_custom_call.1} parent=35 // pred_fallthru
            _
          %263 = vnop
        $region36: #{tpu_custom_call.1} parent=31 // pred_fallthru
          _
      $region32: #{tpu_custom_call.1} parent=5 // pred_fallthru
        _
      %p264 = scmp.le.s32.totalorder 1, %s16
      %p265 = scmp.lt.s32.totalorder %s16, 5
      %p266 = pnand %p264, %p265
      %p267 = pneg %p266
      // Predicated region
      $region71: #{tpu_custom_call.1} parent=5 // pred_check
        _
      $region72: #{tpu_custom_call.1} parent=5 // pred_check_branch
        %269 = sbr.rel (%p266) target = $region74
      $region73: #{tpu_custom_call.1} parent=5 // pred_region
        %s270 = ssub.s32 %s16, 1
        %s271 = sand.u32 %s43, 1
        %s272 = sand.u32 %s43, 1
        %s273 = smul.addr %s272, 32
        %s274 = scalar_lea.vmem [#allocation3], %s273
        // Predicated region
        $region75: #{tpu_custom_call.1} parent=73 // pred_check
          %p275 = pneg %p56
        $region76: #{tpu_custom_call.1} parent=73 // pred_check_branch
          %277 = sbr.rel (%p275) target = $region78
        $region77: #{tpu_custom_call.1} parent=73 // pred_region
          _
        $region78: #{tpu_custom_call.1} parent=73 // pred_fallthru
          _
        // Predicated region
        $region79: #{tpu_custom_call.1} parent=73 // pred_check
          %p278 = pneg %p119
        $region80: #{tpu_custom_call.1} parent=73 // pred_check_branch
          %280 = sbr.rel (%p278) target = $region82
        $region81: #{tpu_custom_call.1} parent=73 // pred_region
          %281 = dma.done [#allocation5], 2048
        $region82: #{tpu_custom_call.1} parent=73 // pred_fallthru
          _
        %s282 = sand.u32 %s43, 1
        %s283 = sand.u32 %s43, 1
        %s284 = smul.addr %s283, 32
        %s285 = scalar_lea.vmem [#allocation3], %s284
        %p286 = pneg %p56
        %p287 = pneg %p53
        %p288 = pneg %p77
        %p289 = pneg %p74
        %p290 = pneg %p98
        %p291 = pneg %p95
        %p292 = pneg %p119
        %p293 = pneg %p116
        %p294 = pneg %p140
        %p295 = pneg %p137
        %p296 = pneg %p168
        %p297 = pneg %p165
        %s298 = sand.u32 %s155, 1
        %s299 = scalar_lea.sflag [#allocation6], %s298
        %s300 = sand.u32 %s155, 1
        %s301 = smul.addr %s300, 32
        %s302 = scalar_lea.vmem [#allocation7], %s301
        %v303 = vld [vmem:[%s274] sm:$0xff]
        %v304 = vld [vmem:[%s274 + $0x8] sm:$0xff]
        %v305 = vld [vmem:[%s274 + $0x10] sm:$0xff]
        %v306 = vld [vmem:[%s274 + $0x18] sm:$0xff]
        %v307 = vld [vmem:[%s1] sm:$0xff]
        %v308 = vld [vmem:[%s1 + $0x8] sm:$0xff]
        %v309 = vld [vmem:[%s1 + $0x10] sm:$0xff]
        %v310 = vld [vmem:[%s1 + $0x18] sm:$0xff]
        %v311 = vld [vmem:[%s1 + $0x20] sm:$0xff]
        %v312 = vld [vmem:[%s1 + $0x28] sm:$0xff]
        %v313 = vld [vmem:[%s2] sm:$0xff]
        %v314 = vld [vmem:[%s2 + $0x8] sm:$0xff]
        %v315 = vld [vmem:[%s2 + $0x10] sm:$0xff]
        %v316 = vld [vmem:[%s2 + $0x18] sm:$0xff]
        %v317 = vld [vmem:[%s2 + $0x20] sm:$0xff]
        %v318 = vld [vmem:[%s2 + $0x28] sm:$0xff]
        %320 = vset.pattern.permute.xlu0 0
        %321 = vperm.xlu0 %320, %v313
        %v322 = vpop.permute.xlu0 %321
        %325 = vset.pattern.permute.xlu0 0
        %326 = vperm.xlu0 %325, %v314
        %v327 = vpop.permute.xlu0 %326
        %330 = vset.pattern.permute.xlu0 0
        %331 = vperm.xlu0 %330, %v315
        %v332 = vpop.permute.xlu0 %331
        %335 = vset.pattern.permute.xlu0 0
        %336 = vperm.xlu0 %335, %v316
        %v337 = vpop.permute.xlu0 %336
        %340 = vset.pattern.permute.xlu0 0
        %341 = vperm.xlu0 %340, %v317
        %v342 = vpop.permute.xlu0 %341
        %345 = vset.pattern.permute.xlu0 0
        %346 = vperm.xlu0 %345, %v318
        %v347 = vpop.permute.xlu0 %346
        %vm349 = vcmask 261120
        %v351 = vsel %vm349, %v307, 0
        %v354 = vsel %vm349, %v308, 0
        %v357 = vsel %vm349, %v309, 0
        %v360 = vsel %vm349, %v310, 0
        %v363 = vsel %vm349, %v311, 0
        %v366 = vsel %vm349, %v312, 0
        %368 = vmatprep.subr.mxu0 0.0
        %369 = vmatpush1.msra.mxu0 %v303
        %370 = vmatprep.subr.mxu0 0.0
        %371 = vmatpush1.msra.mxu0 %v304
        %372 = vmatprep.subr.mxu0 0.0
        %373 = vmatpush1.msra.mxu0 %v305
        %374 = vmatprep.subr.mxu0 0.0
        %375 = vmatpush1.msra.mxu0 %v306
        %376 = vmatprep.subr.mxu0 0.0
        %377 = vmatpush1.msra.mxu0 0.0
        %378 = vmatprep.subr.mxu0 0.0
        %379 = vmatpush1.msra.mxu0 0.0
        %380 = vmatprep.subr.mxu0 0.0
        %381 = vmatpush1.msra.mxu0 0.0
        %382 = vmatprep.subr.mxu0 0.0
        %383 = vmatpush1.msra.mxu0 0.0
        %384 = vmatprep.subr.mxu0 0.0
        %385 = vmatpush1.msra.mxu0 0.0
        %386 = vmatprep.subr.mxu0 0.0
        %387 = vmatpush1.msra.mxu0 0.0
        %388 = vmatprep.subr.mxu0 0.0
        %389 = vmatpush1.msra.mxu0 0.0
        %390 = vmatprep.subr.mxu0 0.0
        %391 = vmatpush1.msra.mxu0 0.0
        %392 = vmatprep.subr.mxu0 0.0
        %393 = vmatpush1.msra.mxu0 0.0
        %394 = vmatprep.subr.mxu0 0.0
        %395 = vmatpush1.msra.mxu0 0.0
        %396 = vmatprep.subr.mxu0 0.0
        %397 = vmatpush1.msra.mxu0 0.0
        %398 = vmatprep.subr.mxu0 0.0
        %399 = vmatpush1.msra.mxu0 0.0
        %400 = vmatprep.subr.mxu0 0.0
        %401 = vmatpush1.msra.mxu0 0.0
        %402 = vmatprep.subr.mxu0 0.0
        %403 = vmatpush1.msra.mxu0 0.0
        %404 = vmatprep.subr.mxu0 0.0
        %405 = vmatpush1.msra.mxu0 0.0
        %406 = vmatprep.subr.mxu0 0.0
        %407 = vmatpush1.msra.mxu0 0.0
        %408 = vmatprep.subr.mxu0 0.0
        %409 = vmatpush1.msra.mxu0 0.0
        %410 = vmatprep.subr.mxu0 0.0
        %411 = vmatpush1.msra.mxu0 0.0
        %412 = vmatprep.subr.mxu0 0.0
        %413 = vmatpush1.msra.mxu0 0.0
        %414 = vmatprep.subr.mxu0 0.0
        %415 = vmatpush1.msra.mxu0 0.0
        %416 = vmatprep.subr.mxu0 0.0
        %417 = vmatpush1.msra.mxu0 0.0
        %418 = vmatprep.subr.mxu0 0.0
        %419 = vmatpush1.msra.mxu0 0.0
        %420 = vmatprep.subr.mxu0 0.0
        %421 = vmatpush1.msra.mxu0 0.0
        %422 = vmatprep.subr.mxu0 0.0
        %423 = vmatpush1.msra.mxu0 0.0
        %424 = vmatprep.subr.mxu0 0.0
        %425 = vmatpush1.msra.mxu0 0.0
        %426 = vmatprep.subr.mxu0 0.0
        %427 = vmatpush1.msra.mxu0 0.0
        %428 = vmatprep.subr.mxu0 0.0
        %429 = vmatpush1.msra.mxu0 0.0
        %430 = vmatprep.subr.mxu0 0.0
        %431 = vmatpush1.msra.mxu0 0.0
        %432 = vmatprep.mubr.f32.mxu0 0.0
        %433 = vmatmul.mubr.f32.gmra.mrb[0].mxu0 %v351
        %v434 = vpop.f32.mrb[0].mxu0
        %v435 = vadd.f32 %v322, %v434
        %v436 = vpop.f32.mrb[0].mxu0
        %437 = vmatprep.mubr.f32.mxu0 0.0
        %438 = vmatmul.mubr.f32.gmra.mrb[0].mxu0 %v354
        %v439 = vpop.f32.mrb[0].mxu0
        %v440 = vadd.f32 %v327, %v439
        %v441 = vpop.f32.mrb[0].mxu0
        %442 = vmatprep.mubr.f32.mxu0 0.0
        %443 = vmatmul.mubr.f32.gmra.mrb[0].mxu0 %v357
        %v444 = vpop.f32.mrb[0].mxu0
        %v445 = vadd.f32 %v332, %v444
        %v446 = vpop.f32.mrb[0].mxu0
        %447 = vmatprep.mubr.f32.mxu0 0.0
        %448 = vmatmul.mubr.f32.gmra.mrb[0].mxu0 %v360
        %v449 = vpop.f32.mrb[0].mxu0
        %v450 = vadd.f32 %v337, %v449
        %v451 = vpop.f32.mrb[0].mxu0
        %452 = vmatprep.mubr.f32.mxu0 0.0
        %453 = vmatmul.mubr.f32.gmra.mrb[0].mxu0 %v363
        %v454 = vpop.f32.mrb[0].mxu0
        %v455 = vadd.f32 %v342, %v454
        %v456 = vpop.f32.mrb[0].mxu0
        %457 = vmatprep.mubr.f32.mxu0 0.0
        %458 = vmatmul.mubr.f32.gmra.mrb[0].mxu0 %v366
        %v459 = vpop.f32.mrb[0].mxu0
        %v460 = vadd.f32 %v347, %v459
        %v461 = vpop.f32.mrb[0].mxu0
        %462 = vdwg.mxu0
        %v463 = vld [vmem:[#allocation4] sm:$0xff]
        %v464 = vld [vmem:[#allocation4 + $0x8] sm:$0xff]
        %v465 = vld [vmem:[#allocation4 + $0x10] sm:$0xff]
        %v466 = vld [vmem:[#allocation4 + $0x18] sm:$0xff]
        %v467 = vld [vmem:[#allocation4 + $0x20] sm:$0xff]
        %v468 = vld [vmem:[#allocation4 + $0x28] sm:$0xff]
        %v469 = vld [vmem:[#allocation4 + $0x30] sm:$0xff]
        %v470 = vld [vmem:[#allocation4 + $0x38] sm:$0xff]
        %v471 = vld [vmem:[#allocation4 + $0x40] sm:$0xff]
        %v472 = vld [vmem:[#allocation4 + $0x48] sm:$0xff]
        %v473 = vld [vmem:[#allocation4 + $0x50] sm:$0xff]
        %v474 = vld [vmem:[#allocation4 + $0x58] sm:$0xff]
        %v475 = vld [vmem:[#allocation4 + $0x60] sm:$0xff]
        %v476 = vld [vmem:[#allocation4 + $0x68] sm:$0xff]
        %v477 = vld [vmem:[#allocation4 + $0x70] sm:$0xff]
        %v478 = vld [vmem:[#allocation4 + $0x78] sm:$0xff]
        %s479 = sld [smem:[#allocation2]]
        %480 = vxpose.xlu0.b32.start [1/16] %v440, 128
        %481 = vxpose.xlu0.b32.cont [2/16] 0.0, 128
        %482 = vxpose.xlu0.b32.cont [3/16] 0.0, 128
        %483 = vxpose.xlu0.b32.cont [4/16] 0.0, 128
        %484 = vxpose.xlu0.b32.cont [5/16] 0.0, 128
        %485 = vxpose.xlu0.b32.cont [6/16] 0.0, 128
        %486 = vxpose.xlu0.b32.cont [7/16] 0.0, 128
        %487 = vxpose.xlu0.b32.cont [8/16] 0.0, 128
        %488 = vxpose.xlu0.b32.cont [9/16] 0.0, 128
        %489 = vxpose.xlu0.b32.cont [10/16] 0.0, 128
        %490 = vxpose.xlu0.b32.cont [11/16] 0.0, 128
        %491 = vxpose.xlu0.b32.cont [12/16] 0.0, 128
        %492 = vxpose.xlu0.b32.cont [13/16] 0.0, 128
        %493 = vxpose.xlu0.b32.cont [14/16] 0.0, 128
        %494 = vxpose.xlu0.b32.cont [15/16] 0.0, 128
        %495 = vxpose.xlu0.b32.end [16/16] 0.0, 128
        %v496 = vpop.trf.xlu0
        %v497 = vpop.trf.xlu0
        %v498 = vpop.trf.xlu0
        %v499 = vpop.trf.xlu0
        %v500 = vpop.trf.xlu0
        %v501 = vpop.trf.xlu0
        %v502 = vpop.trf.xlu0
        %v503 = vpop.trf.xlu0
        %v504 = vpop.trf.xlu0
        %v505 = vpop.trf.xlu0
        %v506 = vpop.trf.xlu0
        %v507 = vpop.trf.xlu0
        %v508 = vpop.trf.xlu0
        %v509 = vpop.trf.xlu0
        %v510 = vpop.trf.xlu0
        %v511 = vpop.trf.xlu0
        %vm512 = vcmask 64512
        %v514 = vsel %vm512, %v496, 0
        %v517 = vsel %vm512, %v497, 0
        %v520 = vsel %vm512, %v498, 0
        %v523 = vsel %vm512, %v499, 0
        %v526 = vsel %vm512, %v500, 0
        %v529 = vsel %vm512, %v501, 0
        %v532 = vsel %vm512, %v502, 0
        %v535 = vsel %vm512, %v503, 0
        %v538 = vsel %vm512, %v504, 0
        %v541 = vsel %vm512, %v505, 0
        %v544 = vsel %vm512, %v506, 0
        %v547 = vsel %vm512, %v507, 0
        %v550 = vsel %vm512, %v508, 0
        %v553 = vsel %vm512, %v509, 0
        %v556 = vsel %vm512, %v510, 0
        %v559 = vsel %vm512, %v511, 0
        %561 = vmatprep.subr.mxu0 0.0
        %562 = vmatpush1.msra.mxu0 %v435
        %563 = vmatprep.subr.mxu0 0.0
        %564 = vmatpush1.msra.mxu0 0.0
        %565 = vmatprep.subr.mxu0 0.0
        %566 = vmatpush1.msra.mxu0 0.0
        %567 = vmatprep.subr.mxu0 0.0
        %568 = vmatpush1.msra.mxu0 0.0
        %569 = vmatprep.subr.mxu0 0.0
        %570 = vmatpush1.msra.mxu0 0.0
        %571 = vmatprep.subr.mxu0 0.0
        %572 = vmatpush1.msra.mxu0 0.0
        %573 = vmatprep.subr.mxu0 0.0
        %574 = vmatpush1.msra.mxu0 0.0
        %575 = vmatprep.subr.mxu0 0.0
        %576 = vmatpush1.msra.mxu0 0.0
        %577 = vmatprep.subr.mxu0 0.0
        %578 = vmatpush1.msra.mxu0 0.0
        %579 = vmatprep.subr.mxu0 0.0
        %580 = vmatpush1.msra.mxu0 0.0
        %581 = vmatprep.subr.mxu0 0.0
        %582 = vmatpush1.msra.mxu0 0.0
        %583 = vmatprep.subr.mxu0 0.0
        %584 = vmatpush1.msra.mxu0 0.0
        %585 = vmatprep.subr.mxu0 0.0
        %586 = vmatpush1.msra.mxu0 0.0
        %587 = vmatprep.subr.mxu0 0.0
        %588 = vmatpush1.msra.mxu0 0.0
        %589 = vmatprep.subr.mxu0 0.0
        %590 = vmatpush1.msra.mxu0 0.0
        %591 = vmatprep.subr.mxu0 0.0
        %592 = vmatpush1.msra.mxu0 0.0
        %593 = vmatprep.subr.mxu0 0.0
        %594 = vmatpush1.msra.mxu0 0.0
        %595 = vmatprep.subr.mxu0 0.0
        %596 = vmatpush1.msra.mxu0 0.0
        %597 = vmatprep.subr.mxu0 0.0
        %598 = vmatpush1.msra.mxu0 0.0
        %599 = vmatprep.subr.mxu0 0.0
        %600 = vmatpush1.msra.mxu0 0.0
        %601 = vmatprep.subr.mxu0 0.0
        %602 = vmatpush1.msra.mxu0 0.0
        %603 = vmatprep.subr.mxu0 0.0
        %604 = vmatpush1.msra.mxu0 0.0
        %605 = vmatprep.subr.mxu0 0.0
        %606 = vmatpush1.msra.mxu0 0.0
        %607 = vmatprep.subr.mxu0 0.0
        %608 = vmatpush1.msra.mxu0 0.0
        %609 = vmatprep.subr.mxu0 0.0
        %610 = vmatpush1.msra.mxu0 0.0
        %611 = vmatprep.subr.mxu0 0.0
        %612 = vmatpush1.msra.mxu0 0.0
        %613 = vmatprep.subr.mxu0 0.0
        %614 = vmatpush1.msra.mxu0 0.0
        %615 = vmatprep.subr.mxu0 0.0
        %616 = vmatpush1.msra.mxu0 0.0
        %617 = vmatprep.subr.mxu0 0.0
        %618 = vmatpush1.msra.mxu0 0.0
        %619 = vmatprep.subr.mxu0 0.0
        %620 = vmatpush1.msra.mxu0 0.0
        %621 = vmatprep.subr.mxu0 0.0
        %622 = vmatpush1.msra.mxu0 0.0
        %623 = vmatprep.subr.mxu0 0.0
        %624 = vmatpush1.msra.mxu0 0.0
        %625 = vmatprep.mubr.f32.mxu0 0.0
        %626 = vmatmul.mubr.f32.gmra.mrb[0].mxu0 %v514
        %v627 = vpop.f32.mrb[0].mxu0
        %v628 = vadd.f32 %v463, %v627
        %v629 = vpop.f32.mrb[0].mxu0
        %630 = vmatprep.mubr.f32.mxu0 0.0
        %631 = vmatmul.mubr.f32.gmra.mrb[0].mxu0 %v517
        %v632 = vpop.f32.mrb[0].mxu0
        %v633 = vadd.f32 %v464, %v632
        %v634 = vpop.f32.mrb[0].mxu0
        %635 = vmatprep.mubr.f32.mxu0 0.0
        %636 = vmatmul.mubr.f32.gmra.mrb[0].mxu0 %v520
        %v637 = vpop.f32.mrb[0].mxu0
        %v638 = vadd.f32 %v465, %v637
        %v639 = vpop.f32.mrb[0].mxu0
        %640 = vmatprep.mubr.f32.mxu0 0.0
        %641 = vmatmul.mubr.f32.gmra.mrb[0].mxu0 %v523
        %v642 = vpop.f32.mrb[0].mxu0
        %v643 = vadd.f32 %v466, %v642
        %v644 = vpop.f32.mrb[0].mxu0
        %645 = vmatprep.mubr.f32.mxu0 0.0
        %646 = vmatmul.mubr.f32.gmra.mrb[0].mxu0 %v526
        %v647 = vpop.f32.mrb[0].mxu0
        %v648 = vadd.f32 %v467, %v647
        %v649 = vpop.f32.mrb[0].mxu0
        %650 = vmatprep.mubr.f32.mxu0 0.0
        %651 = vmatmul.mubr.f32.gmra.mrb[0].mxu0 %v529
        %v652 = vpop.f32.mrb[0].mxu0
        %v653 = vadd.f32 %v468, %v652
        %v654 = vpop.f32.mrb[0].mxu0
        %655 = vmatprep.mubr.f32.mxu0 0.0
        %656 = vmatmul.mubr.f32.gmra.mrb[0].mxu0 %v532
        %v657 = vpop.f32.mrb[0].mxu0
        %v658 = vadd.f32 %v469, %v657
        %v659 = vpop.f32.mrb[0].mxu0
        %660 = vmatprep.mubr.f32.mxu0 0.0
        %661 = vmatmul.mubr.f32.gmra.mrb[0].mxu0 %v535
        %v662 = vpop.f32.mrb[0].mxu0
        %v663 = vadd.f32 %v470, %v662
        %v664 = vpop.f32.mrb[0].mxu0
        %665 = vmatprep.mubr.f32.mxu0 0.0
        %666 = vmatmul.mubr.f32.gmra.mrb[0].mxu0 %v538
        %v667 = vpop.f32.mrb[0].mxu0
        %v668 = vadd.f32 %v471, %v667
        %v669 = vpop.f32.mrb[0].mxu0
        %670 = vmatprep.mubr.f32.mxu0 0.0
        %671 = vmatmul.mubr.f32.gmra.mrb[0].mxu0 %v541
        %v672 = vpop.f32.mrb[0].mxu0
        %v673 = vadd.f32 %v472, %v672
        %v674 = vpop.f32.mrb[0].mxu0
        %675 = vmatprep.mubr.f32.mxu0 0.0
        %676 = vmatmul.mubr.f32.gmra.mrb[0].mxu0 %v544
        %v677 = vpop.f32.mrb[0].mxu0
        %v678 = vadd.f32 %v473, %v677
        %v679 = vpop.f32.mrb[0].mxu0
        %680 = vmatprep.mubr.f32.mxu0 0.0
        %681 = vmatmul.mubr.f32.gmra.mrb[0].mxu0 %v547
        %v682 = vpop.f32.mrb[0].mxu0
        %v683 = vadd.f32 %v474, %v682
        %v684 = vpop.f32.mrb[0].mxu0
        %685 = vmatprep.mubr.f32.mxu0 0.0
        %686 = vmatmul.mubr.f32.gmra.mrb[0].mxu0 %v550
        %v687 = vpop.f32.mrb[0].mxu0
        %v688 = vadd.f32 %v475, %v687
        %v689 = vpop.f32.mrb[0].mxu0
        %690 = vmatprep.mubr.f32.mxu0 0.0
        %691 = vmatmul.mubr.f32.gmra.mrb[0].mxu0 %v553
        %v692 = vpop.f32.mrb[0].mxu0
        %v693 = vadd.f32 %v476, %v692
        %v694 = vpop.f32.mrb[0].mxu0
        %695 = vmatprep.mubr.f32.mxu0 0.0
        %696 = vmatmul.mubr.f32.gmra.mrb[0].mxu0 %v556
        %v697 = vpop.f32.mrb[0].mxu0
        %v698 = vadd.f32 %v477, %v697
        %v699 = vpop.f32.mrb[0].mxu0
        %700 = vmatprep.mubr.f32.mxu0 0.0
        %701 = vmatmul.mubr.f32.gmra.mrb[0].mxu0 %v559
        %v702 = vpop.f32.mrb[0].mxu0
        %v703 = vadd.f32 %v478, %v702
        %v704 = vpop.f32.mrb[0].mxu0
        %705 = vdwg.mxu0
        %v706 = vmax.f32 %v628, %v648
        %v707 = vmax.f32 %v633, %v653
        %v708 = vmax.f32 %v638, %v658
        %v709 = vmax.f32 %v643, %v663
        %v710 = vmax.f32 %v706, %v668
        %v711 = vmax.f32 %v707, %v673
        %v712 = vmax.f32 %v708, %v678
        %v713 = vmax.f32 %v709, %v683
        %v714 = vmax.f32 %v710, %v688
        %v715 = vmax.f32 %v711, %v693
        %v716 = vmax.f32 %v712, %v698
        %v717 = vmax.f32 %v713, %v703
        %v718 = vmax.f32 %v714, %v715
        %v719 = vmax.f32 %v716, %v717
        %v720 = vmax.f32 %v718, %v719
        %v721 = vrot.slane %v720, 4
        %v722 = vmax.f32 %v720, %v721
        %v723 = vrot.slane %v722, 2
        %v724 = vmax.f32 %v722, %v723
        %v725 = vrot.slane %v724, 1
        %v726 = vmax.f32 %v724, %v725
        %v727 = vsub.f32 %v628, %v726
        %v728 = vsub.f32 %v633, %v726
        %v729 = vsub.f32 %v638, %v726
        %v730 = vsub.f32 %v643, %v726
        %v731 = vsub.f32 %v648, %v726
        %v732 = vsub.f32 %v653, %v726
        %v733 = vsub.f32 %v658, %v726
        %v734 = vsub.f32 %v663, %v726
        %v735 = vsub.f32 %v668, %v726
        %v736 = vsub.f32 %v673, %v726
        %v737 = vsub.f32 %v678, %v726
        %v738 = vsub.f32 %v683, %v726
        %v739 = vsub.f32 %v688, %v726
        %v740 = vsub.f32 %v693, %v726
        %v741 = vsub.f32 %v698, %v726
        %v742 = vsub.f32 %v703, %v726
        %v743 = vmul.f32 %v727, 1.442695
        %v744 = vpow.pop %v743
        %v745 = vmul.f32 %v728, 1.442695
        %v746 = vpow.pop %v745
        %v747 = vmul.f32 %v729, 1.442695
        %v748 = vpow.pop %v747
        %v749 = vmul.f32 %v730, 1.442695
        %v750 = vpow.pop %v749
        %v751 = vmul.f32 %v731, 1.442695
        %v752 = vpow.pop %v751
        %v753 = vmul.f32 %v732, 1.442695
        %v754 = vpow.pop %v753
        %v755 = vmul.f32 %v733, 1.442695
        %v756 = vpow.pop %v755
        %v757 = vmul.f32 %v734, 1.442695
        %v758 = vpow.pop %v757
        %v759 = vmul.f32 %v735, 1.442695
        %v760 = vpow.pop %v759
        %v761 = vmul.f32 %v736, 1.442695
        %v762 = vpow.pop %v761
        %v763 = vmul.f32 %v737, 1.442695
        %v764 = vpow.pop %v763
        %v765 = vmul.f32 %v738, 1.442695
        %v766 = vpow.pop %v765
        %v767 = vmul.f32 %v739, 1.442695
        %v768 = vpow.pop %v767
        %v769 = vmul.f32 %v740, 1.442695
        %v770 = vpow.pop %v769
        %v771 = vmul.f32 %v741, 1.442695
        %v772 = vpow.pop %v771
        %v773 = vmul.f32 %v742, 1.442695
        %v774 = vpow.pop %v773
        %v775 = vadd.f32 %v744, %v746
        %v776 = vadd.f32 %v775, %v748
        %v777 = vadd.f32 %v776, %v750
        %v778 = vadd.f32 %v777, %v752
        %v779 = vadd.f32 %v778, %v754
        %v780 = vadd.f32 %v779, %v756
        %v781 = vadd.f32 %v780, %v758
        %v782 = vadd.f32 %v781, %v760
        %v783 = vadd.f32 %v782, %v762
        %v784 = vadd.f32 %v783, %v764
        %v785 = vadd.f32 %v784, %v766
        %v786 = vadd.f32 %v785, %v768
        %v787 = vadd.f32 %v786, %v770
        %v788 = vadd.f32 %v787, %v772
        %v789 = vadd.f32 %v788, %v774
        %v790 = vrot.slane %v789, 4
        %v791 = vadd.f32 %v789, %v790
        %v792 = vrot.slane %v791, 2
        %v793 = vadd.f32 %v791, %v792
        %v794 = vrot.slane %v793, 1
        %v795 = vadd.f32 %v793, %v794
        %796 = vmatprep.subr.mxu0 0.0
        %797 = vmatpush1.msra.mxu0 %v744
        %798 = vmatprep.subr.mxu0 0.0
        %799 = vmatpush1.msra.mxu0 %v746
        %800 = vmatprep.subr.mxu0 0.0
        %801 = vmatpush1.msra.mxu0 %v748
        %802 = vmatprep.subr.mxu0 0.0
        %803 = vmatpush1.msra.mxu0 %v750
        %804 = vmatprep.subr.mxu0 0.0
        %805 = vmatpush1.msra.mxu0 %v752
        %806 = vmatprep.subr.mxu0 0.0
        %807 = vmatpush1.msra.mxu0 %v754
        %808 = vmatprep.subr.mxu0 0.0
        %809 = vmatpush1.msra.mxu0 %v756
        %810 = vmatprep.subr.mxu0 0.0
        %811 = vmatpush1.msra.mxu0 %v758
        %812 = vmatprep.subr.mxu0 0.0
        %813 = vmatpush1.msra.mxu0 %v760
        %814 = vmatprep.subr.mxu0 0.0
        %815 = vmatpush1.msra.mxu0 %v762
        %816 = vmatprep.subr.mxu0 0.0
        %817 = vmatpush1.msra.mxu0 %v764
        %818 = vmatprep.subr.mxu0 0.0
        %819 = vmatpush1.msra.mxu0 %v766
        %820 = vmatprep.subr.mxu0 0.0
        %821 = vmatpush1.msra.mxu0 %v768
        %822 = vmatprep.subr.mxu0 0.0
        %823 = vmatpush1.msra.mxu0 %v770
        %824 = vmatprep.subr.mxu0 0.0
        %825 = vmatpush1.msra.mxu0 %v772
        %826 = vmatprep.subr.mxu0 0.0
        %827 = vmatpush1.msra.mxu0 %v774
        %828 = vmatprep.subr.mxu0 0.0
        %829 = vmatpush1.msra.mxu0 0.0
        %830 = vmatprep.subr.mxu0 0.0
        %831 = vmatpush1.msra.mxu0 0.0
        %832 = vmatprep.subr.mxu0 0.0
        %833 = vmatpush1.msra.mxu0 0.0
        %834 = vmatprep.subr.mxu0 0.0
        %835 = vmatpush1.msra.mxu0 0.0
        %836 = vmatprep.subr.mxu0 0.0
        %837 = vmatpush1.msra.mxu0 0.0
        %838 = vmatprep.subr.mxu0 0.0
        %839 = vmatpush1.msra.mxu0 0.0
        %840 = vmatprep.subr.mxu0 0.0
        %841 = vmatpush1.msra.mxu0 0.0
        %842 = vmatprep.subr.mxu0 0.0
        %843 = vmatpush1.msra.mxu0 0.0
        %844 = vmatprep.subr.mxu0 0.0
        %845 = vmatpush1.msra.mxu0 0.0
        %846 = vmatprep.subr.mxu0 0.0
        %847 = vmatpush1.msra.mxu0 0.0
        %848 = vmatprep.subr.mxu0 0.0
        %849 = vmatpush1.msra.mxu0 0.0
        %850 = vmatprep.subr.mxu0 0.0
        %851 = vmatpush1.msra.mxu0 0.0
        %852 = vmatprep.subr.mxu0 0.0
        %853 = vmatpush1.msra.mxu0 0.0
        %854 = vmatprep.subr.mxu0 0.0
        %855 = vmatpush1.msra.mxu0 0.0
        %856 = vmatprep.subr.mxu0 0.0
        %857 = vmatpush1.msra.mxu0 0.0
        %858 = vmatprep.subr.mxu0 0.0
        %859 = vmatpush1.msra.mxu0 0.0
        %860 = vmatprep.mubr.f32.mxu0 0.0
        %861 = vmatmul.mubr.f32.gmra.mrb[0].mxu0 %v445
        %v862 = vpop.f32.mrb[0].mxu0
        %v863 = vadd.f32 0.0, %v862
        %v864 = vpop.f32.mrb[0].mxu0
        %865 = vmatprep.mubr.f32.mxu0 0.0
        %866 = vmatmul.mubr.f32.gmra.mrb[0].mxu0 %v450
        %v867 = vpop.f32.mrb[0].mxu0
        %v868 = vadd.f32 0.0, %v867
        %v869 = vpop.f32.mrb[0].mxu0
        %870 = vmatprep.mubr.f32.mxu0 0.0
        %871 = vmatmul.mubr.f32.gmra.mrb[0].mxu0 %v455
        %v872 = vpop.f32.mrb[0].mxu0
        %v873 = vadd.f32 0.0, %v872
        %v874 = vpop.f32.mrb[0].mxu0
        %875 = vmatprep.mubr.f32.mxu0 0.0
        %876 = vmatmul.mubr.f32.gmra.mrb[0].mxu0 %v460
        %v877 = vpop.f32.mrb[0].mxu0
        %v878 = vadd.f32 0.0, %v877
        %v879 = vpop.f32.mrb[0].mxu0
        %880 = vdwg.mxu0
        %v881 = vrcp.pop %v795
        %v882 = vmul.f32 %v863, %v881
        %v883 = vmul.f32 %v868, %v881
        %v884 = vmul.f32 %v873, %v881
        %v885 = vmul.f32 %v878, %v881
        %v886 = vstv %s479
        %v887 = vmul.f32 %v886, %v882
        %v888 = vmul.f32 %v886, %v883
        %v889 = vmul.f32 %v886, %v884
        %v890 = vmul.f32 %v886, %v885
        %v891 = vadd.f32 %v887, %v303
        %v892 = vadd.f32 %v888, %v304
        %v893 = vadd.f32 %v889, %v305
        %v894 = vadd.f32 %v890, %v306
        %895 = vst [vmem:[%s302] sm:$0xff] %v891
        %896 = vst [vmem:[%s302 + $0x8] sm:$0xff] %v892
        %897 = vst [vmem:[%s302 + $0x10] sm:$0xff] %v893
        %898 = vst [vmem:[%s302 + $0x18] sm:$0xff] %v894
        %s899 = sand.u32 %s155, 1
        %s900 = scalar_lea.sflag [#allocation6], %s899
        %s901 = sand.u32 %s155, 1
        %s902 = smul.addr %s901, 32
        %s903 = scalar_lea.vmem [#allocation7], %s902
        // Predicated region
        $region83: #{tpu_custom_call.1} parent=73 // pred_check
          %p904 = pneg %p165
        $region84: #{tpu_custom_call.1} parent=73 // pred_check_branch
          %906 = sbr.rel (%p904) target = $region86
        $region85: #{tpu_custom_call.1} parent=73 // pred_region
          %s908 = ssub.s32 512, 512
          %909 = vsyncadd %s900, %s908
          %s910 = smul.addr %s25, 8
          %s911 = sadd.s32 %s26, %s910
          %s912 = smul.addr %s911, 128
          %s913 = scalar_lea.hbm %s5, %s912
          %s914 = sshll.u32 %s903, 4
          %s915 = int_to_ptr.vmem [resolvable:$true] %s914
          %920 = dma.vmem_to_hbm [thread:$0]  %s915, 512, %s913, %s900, 128, 256, 8
        $region86: #{tpu_custom_call.1} parent=73 // pred_fallthru
          _
      $region74: #{tpu_custom_call.1} parent=5 // pred_fallthru
        _
      %p921 = scmp.le.s32.totalorder 2, %s16
      // Predicated region
      $region87: #{tpu_custom_call.1} parent=5 // pred_check
        %p922 = pneg %p921
      $region88: #{tpu_custom_call.1} parent=5 // pred_check_branch
        %924 = sbr.rel (%p922) target = $region90
      $region89: #{tpu_custom_call.1} parent=5 // pred_region
        %s925 = ssub.s32 %s16, 2
        // Predicated region
        $region91: #{tpu_custom_call.1} parent=89 // pred_check
          %p926 = pneg %p171
        $region92: #{tpu_custom_call.1} parent=89 // pred_check_branch
          %928 = sbr.rel (%p926) target = $region94
        $region93: #{tpu_custom_call.1} parent=89 // pred_region
          %s929 = sand.u32 %s156, 1
          %s930 = scalar_lea.sflag [#allocation6], %s929
          %s931 = sand.u32 %s156, 1
          %s932 = smul.addr %s931, 32
          %s933 = scalar_lea.vmem [#allocation7], %s932
          %934 = dma.done %s930, 512
        $region94: #{tpu_custom_call.1} parent=89 // pred_fallthru
          _
      $region90: #{tpu_custom_call.1} parent=5 // pred_fallthru
        _
    $region6: #{tpu_custom_call.1} parent=1 // loop_footer
      %s20 = sadd.s32 1, %s16
    $region7: #{tpu_custom_call.1} parent=1 // loop_footer_branch
      %15 = sbr.rel target = $region3
    $region8: #{tpu_custom_call.1} parent=1 // loop_exit
      _
    %935 = vsyncpa [#allocation5], 1
    %s936 = scalar_lea.sflag [#allocation5], 1
    %937 = vsyncpa %s936, 1
    %938 = vsyncpa [#allocation6], 1
    %s939 = scalar_lea.sflag [#allocation6], 1
    %940 = vsyncpa %s939, 1

</llo_original>
